<compile_context>
chip_gen: v7x
topology: tpu7x:2x2x1
jax: 0.10.0
libtpu: 0.0.40
codegen_flags: <defaults>
</compile_context>

<pallas_src>
import functools

import jax
import jax.numpy as jnp
from jax.experimental import pallas as pl
from jax.experimental.pallas import tpu as pltpu


def _repeat_cat_kernel(x_ref, o_ref, *, hw, k_minus_1):
    # x_ref: (bc_tile, T*HW)    o_ref: (bc_tile, (T + k_minus_1) * HW)
    # Prefix: (K-1) copies of frame 0 written at lane offsets r*HW.  Each store
    # re-reads frame 0 straight from VMEM (free) and keeps live ranges to one
    # frame; offsets are 128-aligned whenever HW % 128 == 0.
    for r in range(k_minus_1):
        o_ref[:, r * hw:(r + 1) * hw] = x_ref[:, :hw]
    # Bulk copy of the whole input row at lane offset (K-1)*HW.
    o_ref[:, k_minus_1 * hw:] = x_ref[...]


def _sublane_pack(dtype) -> int:
    # Rows per sublane tile: 8 for 32-bit, 16 for bf16, 32 for int8.
    itemsize = jnp.dtype(dtype).itemsize
    return 8 * max(1, 4 // itemsize)


def _padded_block_bytes(rows, lanes, dtype) -> int:
    itemsize = jnp.dtype(dtype).itemsize
    pack = _sublane_pack(dtype)
    pr = -(-rows // pack) * pack
    pc = -(-lanes // 128) * 128
    return pr * pc * itemsize


def repeat_cat(x: jax.Array, kernel_size: int,
               *, vmem_budget_bytes: int = 8 * 1024 * 1024) -> jax.Array:
    """Pallas implementation of RepeatCat.forward for x of shape (B, C, T, H, W)."""
    assert x.ndim == 5, "expected (B, C, T, H, W)"
    B, C, T, H, W = x.shape
    K = int(kernel_size)
    assert K >= 1
    if K == 1:
        # repeat(1,1,0,1,1) -> empty tensor; concat is identity.
        return x

    T_out = T + (K - 1)
    BC, HW = B * C, H * W
    lanes_in, lanes_out = T * HW, T_out * HW
    itemsize = jnp.dtype(x.dtype).itemsize
    x_flat = x.reshape(BC, lanes_in)

    # ---- tile sizing -------------------------------------------------------
    pack = _sublane_pack(x.dtype)
    # Clamp the per-step payload so the double-buffered footprint stays well
    # inside even v7x's 64 MiB physical VMEM.
    vmem_budget_bytes = max(64 * 1024, min(int(vmem_budget_bytes), 20 * 1024 * 1024))
    row_bytes = (lanes_in + lanes_out) * itemsize        # in-row + out-row
    by_budget = vmem_budget_bytes // max(row_bytes, 1)
    if by_budget >= BC or BC <= pack:
        bc_tile = BC                                     # full dim: always legal
    else:
        bc_tile = max(pack, (by_budget // pack) * pack)  # sublane-pack multiple
    # Give megacore (v7x) at least 2 grid steps when B*C permits it.
    if BC >= 2 * pack and bc_tile >= BC:
        bc_tile = max(pack, ((BC // 2) // pack) * pack)
    # TODO(synk): if a single (T*H*W) row ever exceeds the VMEM budget, add a
    # second "arbitrary" grid axis over the flattened lane dim (frame-0 prefix
    # handled only in the first lane chunk); that axis would also feed both
    # v7x cores when B*C is tiny.

    grid = (pl.cdiv(BC, bc_tile),)    # ragged last block is masked by Pallas

    # ---- VMEM limit / cost from the real double-buffered footprint ---------
    block_bytes = (_padded_block_bytes(bc_tile, lanes_in, x.dtype)
                   + _padded_block_bytes(bc_tile, lanes_out, x.dtype))
    vmem_limit = min(2 * block_bytes + 4 * 1024 * 1024, 48 * 1024 * 1024)
    vmem_limit = max(vmem_limit, 8 * 1024 * 1024)
    bytes_accessed = (BC * lanes_in + BC * lanes_out) * itemsize

    kernel = functools.partial(_repeat_cat_kernel, hw=HW, k_minus_1=K - 1)

    out = pl.pallas_call(
        kernel,
        out_shape=jax.ShapeDtypeStruct((BC, lanes_out), x.dtype),
        grid_spec=pltpu.PrefetchScalarGridSpec(
            num_scalar_prefetch=0,
            grid=grid,
            # Last block dims equal the full (lane) array dims -> (8,128) rule
            # satisfied; sublane dim is a pack multiple (or the full B*C).
            in_specs=[pl.BlockSpec((bc_tile, lanes_in), lambda i: (i, 0))],
            out_specs=pl.BlockSpec((bc_tile, lanes_out), lambda i: (i, 0)),
        ),
        compiler_params=pltpu.CompilerParams(
            dimension_semantics=("parallel",),   # shards across v7x TCs
            vmem_limit_bytes=int(vmem_limit),
        ),
        cost_estimate=pl.CostEstimate(
            flops=0, transcendentals=0, bytes_accessed=int(bytes_accessed)),
    )(x_flat)

    return out.reshape(B, C, T_out, H, W)


def repeat_cat_ref(x: jax.Array, kernel_size: int) -> jax.Array:
    """Pure-JAX reference identical to the PyTorch forward."""
    first = x[:, :, :1]
    rep = jnp.tile(first, (1, 1, kernel_size - 1, 1, 1))
    return jnp.concatenate([rep, x], axis=2)


if __name__ == "__main__":
    key = jax.random.PRNGKey(0)
    B, C, T, H, W = 2, 4, 8, 16, 16
    kernel_size = 3  # module __init__ arg

    x = jax.random.normal(key, (B, C, T, H, W), dtype=jnp.float32)

    out = repeat_cat(x, kernel_size)
    out = jax.block_until_ready(out)

    ref = repeat_cat_ref(x, kernel_size)
    assert out.shape == (B, C, T + kernel_size - 1, H, W), out.shape
    assert jnp.array_equal(out, ref), "mismatch vs reference"

    print("KERNEL_OK")
</pallas_src>

<mosaic_0001>
module attributes {stable_mosaic.version = 11 : i64} {
  func.func @_repeat_cat_kernel(%arg0: i32, %arg1: memref<8x2048xf32, #tpu.memory_space<vmem>>, %arg2: memref<8x2560xf32, #tpu.memory_space<vmem>>) attributes {dimension_semantics = [#tpu.dimension_semantics<parallel>], iteration_bounds = array<i64: 1>, scalar_prefetch = 0 : i64, scratch_operands = 0 : i64, tpu.core_type = #tpu.core_type<tc>, window_params = [{transform_indices = @transform_0, window_bounds = array<i64: 8, 2048>}, {transform_indices = @transform_1, window_bounds = array<i64: 8, 2560>}]} {
    %c0 = arith.constant 0 : index
    %c0_0 = arith.constant 0 : index
    %0 = vector.load %arg1[%c0, %c0_0] : memref<8x2048xf32, #tpu.memory_space<vmem>>, vector<8x256xf32>
    %c0_1 = arith.constant 0 : index
    %c0_2 = arith.constant 0 : index
    %1 = vector.load %arg2[%c0_1, %c0_2] : memref<8x2560xf32, #tpu.memory_space<vmem>>, vector<8x256xf32>
    tpu.vector_store %arg2[%c0_1, %c0_2], %0 {strides = array<i32>} : memref<8x2560xf32, #tpu.memory_space<vmem>>, vector<8x256xf32>,
    %c0_3 = arith.constant 0 : index
    %c0_4 = arith.constant 0 : index
    %2 = vector.load %arg1[%c0_3, %c0_4] : memref<8x2048xf32, #tpu.memory_space<vmem>>, vector<8x256xf32>
    %c0_5 = arith.constant 0 : index
    %c256 = arith.constant 256 : index
    %3 = vector.load %arg2[%c0_5, %c256] : memref<8x2560xf32, #tpu.memory_space<vmem>>, vector<8x256xf32>
    tpu.vector_store %arg2[%c0_5, %c256], %2 {strides = array<i32>} : memref<8x2560xf32, #tpu.memory_space<vmem>>, vector<8x256xf32>,
    %c0_6 = arith.constant 0 : index
    %c0_7 = arith.constant 0 : index
    %4 = vector.load %arg1[%c0_6, %c0_7] : memref<8x2048xf32, #tpu.memory_space<vmem>>, vector<8x2048xf32>
    %c0_8 = arith.constant 0 : index
    %c512 = arith.constant 512 : index
    %5 = vector.load %arg2[%c0_8, %c512] : memref<8x2560xf32, #tpu.memory_space<vmem>>, vector<8x2048xf32>
    tpu.vector_store %arg2[%c0_8, %c512], %4 {strides = array<i32>} : memref<8x2560xf32, #tpu.memory_space<vmem>>, vector<8x2048xf32>,
    return
  }
  func.func @transform_0(%arg0: i32) -> (i32, i32) {
    %c0_i32 = arith.constant 0 : i32
    %c0_i32_0 = arith.constant 0 : i32
    return %arg0, %c0_i32 : i32, i32
  }
  func.func @transform_1(%arg0: i32) -> (i32, i32) {
    %c0_i32 = arith.constant 0 : i32
    %c0_i32_0 = arith.constant 0 : i32
    return %arg0, %c0_i32 : i32, i32
  }
}

</mosaic_0001>

<llo_original>
// kernel: tpu_custom_call.1
$region0: #{tpu_custom_call.1}
  #allocation0 [shape = 'u32[]', space=smem, size = 0x4, offset = 0x4, fixed_abs, tag = 'smem constant byte address 0x4 - core index']
  #allocation1 [shape = 'u32[144,128]{1,0:T(1,128)}', space=vmem, size = 0x12000, scoped, tag = 'internal scratch']
  %s0 = inlined_call_operand.hbm [shape: f32[8,2048], index: 0, kind: input, shape index: {}]
  %s1 = inlined_call_operand.hbm [shape: f32[8,2560], index: 1, kind: output, shape index: {}]
  %s2 = sld [smem:[#allocation0]]
  $region18: #{tpu_custom_call.1} parent=0
    _
  %s4 = ssub.s32 1, %s2
  %s5 = scalar_select 0, %s4, %s2
  $region1: #{tpu_custom_call.1} parent=0
    #allocation2 [shape = 'u8[65536]{0}', space=vmem, size = 0x10000, scoped, tag = 'input window, operand 0, single buffered']
    #allocation3 [shape = 's32[1]{0}', space=sflag, size = 0x4, scoped, tag = 'scoped memory for tpu_custom_call.1']
    #allocation4 [shape = 's32[1]{0}', space=sflag, size = 0x4, scoped, tag = 'scoped memory for tpu_custom_call.1']
    #allocation5 [shape = 'u8[81920]{0}', space=vmem, size = 0x14000, scoped, tag = 'output window, operand 0, single buffered']
    %6 = vsyncpa [#allocation3], 0
    %7 = vsyncpa [#allocation4], 0
    // Predicated region
    $region2: #{tpu_custom_call.1} parent=1 // pred_check
      _
    $region3: #{tpu_custom_call.1} parent=1 // pred_check_branch
      %9 = sbr.rel (0) target = $region5
    $region4: #{tpu_custom_call.1} parent=1 // pred_region
      %s11 = ssub.s32 2048, 2048
      %12 = vsyncadd [#allocation3], %s11
      %s14 = sshll.u32 [#allocation2], 4
      %s15 = int_to_ptr.vmem [resolvable:$true] %s14
      %17 = dma.hbm_to_vmem [thread:$0]  %s0, 2048, %s15, [#allocation3]
    $region5: #{tpu_custom_call.1} parent=1 // pred_fallthru
      _
    // Predicated region
    $region6: #{tpu_custom_call.1} parent=1 // pred_check
      _
    $region7: #{tpu_custom_call.1} parent=1 // pred_check_branch
      %19 = sbr.rel (0) target = $region9
    $region8: #{tpu_custom_call.1} parent=1 // pred_region
      %20 = dma.done [#allocation3], 2048
    $region9: #{tpu_custom_call.1} parent=1 // pred_fallthru
      _
    %v21 = vld [vmem:[#allocation2] sm:$0xff]
    %v22 = vld [vmem:[#allocation2 + $0x8] sm:$0xff]
    %23 = vst [vmem:[#allocation5] sm:$0xff] %v21
    %24 = vst [vmem:[#allocation5 + $0x8] sm:$0xff] %v22
    %v25 = vld [vmem:[#allocation2] sm:$0xff]
    %v26 = vld [vmem:[#allocation2 + $0x8] sm:$0xff]
    %27 = vst [vmem:[#allocation5 + $0x10] sm:$0xff] %v25
    %28 = vst [vmem:[#allocation5 + $0x18] sm:$0xff] %v26
    %v29 = vld [vmem:[#allocation2] sm:$0xff]
    %v30 = vld [vmem:[#allocation2 + $0x8] sm:$0xff]
    %v31 = vld [vmem:[#allocation2 + $0x10] sm:$0xff]
    %v32 = vld [vmem:[#allocation2 + $0x18] sm:$0xff]
    %v33 = vld [vmem:[#allocation2 + $0x20] sm:$0xff]
    %v34 = vld [vmem:[#allocation2 + $0x28] sm:$0xff]
    %v35 = vld [vmem:[#allocation2 + $0x30] sm:$0xff]
    %v36 = vld [vmem:[#allocation2 + $0x38] sm:$0xff]
    %v37 = vld [vmem:[#allocation2 + $0x40] sm:$0xff]
    %v38 = vld [vmem:[#allocation2 + $0x48] sm:$0xff]
    %v39 = vld [vmem:[#allocation2 + $0x50] sm:$0xff]
    %v40 = vld [vmem:[#allocation2 + $0x58] sm:$0xff]
    %v41 = vld [vmem:[#allocation2 + $0x60] sm:$0xff]
    %v42 = vld [vmem:[#allocation2 + $0x68] sm:$0xff]
    %v43 = vld [vmem:[#allocation2 + $0x70] sm:$0xff]
    %v44 = vld [vmem:[#allocation2 + $0x78] sm:$0xff]
    %45 = vst [vmem:[#allocation5 + $0x20] sm:$0xff] %v29
    %46 = vst [vmem:[#allocation5 + $0x28] sm:$0xff] %v30
    %47 = vst [vmem:[#allocation5 + $0x30] sm:$0xff] %v31
    %48 = vst [vmem:[#allocation5 + $0x38] sm:$0xff] %v32
    %49 = vst [vmem:[#allocation5 + $0x40] sm:$0xff] %v33
    %50 = vst [vmem:[#allocation5 + $0x48] sm:$0xff] %v34
    %51 = vst [vmem:[#allocation5 + $0x50] sm:$0xff] %v35
    %52 = vst [vmem:[#allocation5 + $0x58] sm:$0xff] %v36
    %53 = vst [vmem:[#allocation5 + $0x60] sm:$0xff] %v37
    %54 = vst [vmem:[#allocation5 + $0x68] sm:$0xff] %v38
    %55 = vst [vmem:[#allocation5 + $0x70] sm:$0xff] %v39
    %56 = vst [vmem:[#allocation5 + $0x78] sm:$0xff] %v40
    %57 = vst [vmem:[#allocation5 + $0x80] sm:$0xff] %v41
    %58 = vst [vmem:[#allocation5 + $0x88] sm:$0xff] %v42
    %59 = vst [vmem:[#allocation5 + $0x90] sm:$0xff] %v43
    %60 = vst [vmem:[#allocation5 + $0x98] sm:$0xff] %v44
    // Predicated region
    $region10: #{tpu_custom_call.1} parent=1 // pred_check
      _
    $region11: #{tpu_custom_call.1} parent=1 // pred_check_branch
      %62 = sbr.rel (0) target = $region13
    $region12: #{tpu_custom_call.1} parent=1 // pred_region
      %s64 = ssub.s32 2560, 2560
      %65 = vsyncadd [#allocation4], %s64
      %s67 = sshll.u32 [#allocation5], 4
      %s68 = int_to_ptr.vmem [resolvable:$true] %s67
      %70 = dma.vmem_to_hbm [thread:$0]  %s68, 2560, %s1, [#allocation4]
    $region13: #{tpu_custom_call.1} parent=1 // pred_fallthru
      _
    // Predicated region
    $region14: #{tpu_custom_call.1} parent=1 // pred_check
      _
    $region15: #{tpu_custom_call.1} parent=1 // pred_check_branch
      %72 = sbr.rel (0) target = $region17
    $region16: #{tpu_custom_call.1} parent=1 // pred_region
      %73 = dma.done [#allocation4], 2560
    $region17: #{tpu_custom_call.1} parent=1 // pred_fallthru
      _
    %74 = vsyncpa [#allocation3], 1
    %75 = vsyncpa [#allocation4], 1

</llo_original>
